<compile_context>
chip_gen: v6e
topology: v6e:2x2x1
jax: 0.10.0
libtpu: 0.0.40
codegen_flags: <defaults>
</compile_context>

<pallas_src>
import functools

import jax
import jax.numpy as jnp
from jax.experimental import pallas as pl
from jax.experimental.pallas import tpu as pltpu

_LANE = 128  # lane width: hidden/output dims are padded to this for lane density


def _round_up(n, m):
    return (n + m - 1) // m * m


def _cdiv(a, b):
    return (a + b - 1) // b


def _pad2d(a, rows, cols):
    return jnp.pad(a, ((0, rows - a.shape[0]), (0, cols - a.shape[1])))


def _mlp_kernel(x_ref, w1_ref, b1_ref, w2_ref, b2_ref, w3_ref, b3_ref,
                w4_ref, b4_ref, o_ref):
    """One batch tile: fc1->ReLU->fc2->ReLU->fc3->ReLU->fc4->log_softmax.

    Dropout layers are identity (eval mode). Padded logit lanes carry a -1e30
    bias baked into b4 (see prepare_params), so they contribute exp(-huge) == 0
    to the softmax reduction and valid columns are numerically unchanged.
    """
    wdt = w1_ref.dtype
    # In-kernel cast of the x tile to the MXU dtype: avoids a separate wrapper
    # HBM pass over x; the cast hides under MXU slack on the VPU.
    x = x_ref[...].astype(wdt)

    # fc1 + ReLU
    h = jnp.dot(x, w1_ref[...], preferred_element_type=jnp.float32) + b1_ref[...]
    h = jnp.maximum(h, 0.0)
    # TODO(synk): training-mode stochastic dropout (pltpu.prng_*) not implemented.

    # fc2 + ReLU
    h = jnp.dot(h.astype(wdt), w2_ref[...],
                preferred_element_type=jnp.float32) + b2_ref[...]
    h = jnp.maximum(h, 0.0)

    # fc3 + ReLU
    h = jnp.dot(h.astype(wdt), w3_ref[...],
                preferred_element_type=jnp.float32) + b3_ref[...]
    h = jnp.maximum(h, 0.0)

    # fc4 (no activation); padded lanes get 0*w + (-1e30) from the baked bias.
    logits = jnp.dot(h.astype(wdt), w4_ref[...],
                     preferred_element_type=jnp.float32) + b4_ref[...]

    # log_softmax over the lane axis (padded lanes vanish in the reduction).
    m = jnp.max(logits, axis=-1, keepdims=True)
    shifted = logits - m
    lse = jnp.log(jnp.sum(jnp.exp(shifted), axis=-1, keepdims=True))
    o_ref[...] = (shifted - lse).astype(o_ref.dtype)


def prepare_params(params, *, compute_dtype=jnp.bfloat16):
    """One-time parameter preparation (hoisted out of the per-call path).

    Pads hidden/output dims to 128 lanes, casts weights to the MXU compute dtype,
    keeps biases in f32, and bakes the padded-class mask (-1e30) into b4.
    Returns (prepared_params_dict, out_dim) where out_dim = 2 * num_classes.
    """
    in_features = params["w1"].shape[0]
    out_dim = params["w4"].shape[1]

    b4 = _pad2d(params["b4"].astype(jnp.float32), 1, _LANE)
    col = jnp.arange(_LANE)[None, :]
    b4 = jnp.where(col < out_dim, b4, jnp.float32(-1e30))

    prepared = dict(
        w1=_pad2d(params["w1"], in_features, _LANE).astype(compute_dtype),
        b1=_pad2d(params["b1"], 1, _LANE).astype(jnp.float32),
        w2=_pad2d(params["w2"], _LANE, _LANE).astype(compute_dtype),
        b2=_pad2d(params["b2"], 1, _LANE).astype(jnp.float32),
        w3=_pad2d(params["w3"], _LANE, _LANE).astype(compute_dtype),
        b3=_pad2d(params["b3"], 1, _LANE).astype(jnp.float32),
        w4=_pad2d(params["w4"], _LANE, _LANE).astype(compute_dtype),
        b4=b4,
    )
    return prepared, out_dim


def neural_net_forward(x, prepared, out_dim, *, tb_max=4096, min_grid_steps=1,
                       out_dtype=jnp.float32):
    """x: [batch, input_size] f32. prepared: output of prepare_params().

    tb_max: cap on rows per batch tile (VMEM working set ~ tb*128*(4+4)*2 bytes,
            well under the 32 MiB scoped limit even at 4096).
    min_grid_steps: set to 2 on v7x so the "parallel" batch axis can shard across
            both TensorCores; leave at 1 on single-TC v5e/v6e.
    out_dtype: dtype of the [padded_batch, 128] output slab (bf16 halves the
            dominant HBM write stream if downstream tolerates it).
    """
    batch, in_features = x.shape

    # Batch tiling: split the 8-row-padded batch into equal TB-row tiles
    # (TB a multiple of 8) so padding waste stays < 8 rows per tile.
    batch8 = _round_up(batch, 8)
    num_tiles = max(_cdiv(batch8, tb_max), min_grid_steps)
    num_tiles = max(min(num_tiles, batch8 // 8), 1)
    tb = _round_up(_cdiv(batch8, num_tiles), 8)
    padded_batch = tb * num_tiles

    x_p = x if padded_batch == batch else jnp.pad(
        x, ((0, padded_batch - batch), (0, 0)))

    resident = lambda i: (0, 0)   # weights/biases: fetched once, VMEM-resident
    batched = lambda i: (i, 0)    # x / out: one batch tile per grid step

    out_full = pl.pallas_call(
        _mlp_kernel,
        out_shape=jax.ShapeDtypeStruct((padded_batch, _LANE), out_dtype),
        grid=(num_tiles,),
        in_specs=[
            pl.BlockSpec((tb, in_features), batched),        # x (f32, cast in-kernel)
            pl.BlockSpec((in_features, _LANE), resident),    # w1
            pl.BlockSpec((1, _LANE), resident),              # b1
            pl.BlockSpec((_LANE, _LANE), resident),          # w2
            pl.BlockSpec((1, _LANE), resident),              # b2
            pl.BlockSpec((_LANE, _LANE), resident),          # w3
            pl.BlockSpec((1, _LANE), resident),              # b3
            pl.BlockSpec((_LANE, _LANE), resident),          # w4
            pl.BlockSpec((1, _LANE), resident),              # b4 (mask baked in)
        ],
        out_specs=pl.BlockSpec((tb, _LANE), batched),
        compiler_params=pltpu.CompilerParams(
            dimension_semantics=("parallel",),               # megacore on v7x
            vmem_limit_bytes=32 * 1024 * 1024,
        ),
    )(x_p, prepared["w1"], prepared["b1"], prepared["w2"], prepared["b2"],
      prepared["w3"], prepared["b3"], prepared["w4"], prepared["b4"])

    # Slice back to the true batch and true logit width (under jit this fuses;
    # callers that can consume the padded slab should skip it entirely).
    return out_full[:batch, :out_dim]


def init_params(key, input_size, hidden_size, num_classes):
    """Deterministic synthetic init; shapes follow the PyTorch module __init__."""
    dims = [
        (input_size, hidden_size),            # fc1
        (hidden_size, hidden_size),           # fc2
        (hidden_size, hidden_size // 2),      # fc3
        (hidden_size // 2, 2 * num_classes),  # fc4
    ]
    params = {}
    for i, (din, dout) in enumerate(dims, start=1):
        key, kw, kb = jax.random.split(key, 3)
        bound = 1.0 / jnp.sqrt(din)
        # PyTorch Linear stores weight as [out, in]; we keep the transposed [in, out].
        params[f"w{i}"] = jax.random.uniform(kw, (din, dout), jnp.float32, -bound, bound)
        params[f"b{i}"] = jax.random.uniform(kb, (1, dout), jnp.float32, -bound, bound)
    return params


def reference_forward(x, params, *, compute_dtype=jnp.bfloat16):
    """Pure-JAX reference applying the SAME bf16 input quantization as the kernel
    (f32 accumulation / bias / ReLU / log-softmax), for a tight numerical check."""
    cd, f32 = compute_dtype, jnp.float32
    h = jnp.dot(x.astype(cd), params["w1"].astype(cd), preferred_element_type=f32) + params["b1"]
    h = jnp.maximum(h, 0.0)
    h = jnp.dot(h.astype(cd), params["w2"].astype(cd), preferred_element_type=f32) + params["b2"]
    h = jnp.maximum(h, 0.0)
    h = jnp.dot(h.astype(cd), params["w3"].astype(cd), preferred_element_type=f32) + params["b3"]
    h = jnp.maximum(h, 0.0)
    logits = jnp.dot(h.astype(cd), params["w4"].astype(cd), preferred_element_type=f32) + params["b4"]
    return jax.nn.log_softmax(logits, axis=1)


if __name__ == "__main__":
    # Small shapes consistent with the module: input_size=32, hidden_size=32, num_classes=2
    batch, input_size, hidden_size, num_classes = 8, 32, 32, 2

    key = jax.random.PRNGKey(0)
    key, kx = jax.random.split(key)
    x = jax.random.normal(kx, (batch, input_size), jnp.float32)
    params = init_params(key, input_size, hidden_size, num_classes)

    # One-time parameter preparation (pad to 128 lanes, bf16 cast, b4 mask).
    prepared, out_dim = prepare_params(params, compute_dtype=jnp.bfloat16)
    prepared = jax.tree_util.tree_map(jax.block_until_ready, prepared)

    fwd = jax.jit(functools.partial(neural_net_forward, prepared=prepared, out_dim=out_dim))
    out = jax.block_until_ready(fwd(x))

    ref = reference_forward(x, params)
    assert out.shape == (batch, 2 * num_classes), out.shape
    assert jnp.allclose(out, ref, atol=1e-4, rtol=1e-4), (
        f"mismatch vs reference, max abs err = {jnp.max(jnp.abs(out - ref))}")

    print("KERNEL_OK")
</pallas_src>

<mosaic_0001>
module attributes {stable_mosaic.version = 11 : i64} {
  func.func @_mlp_kernel(%arg0: i32, %arg1: memref<8x32xf32, #tpu.memory_space<vmem>>, %arg2: memref<32x128xbf16, #tpu.memory_space<vmem>>, %arg3: memref<1x128xf32, #tpu.memory_space<vmem>>, %arg4: memref<128x128xbf16, #tpu.memory_space<vmem>>, %arg5: memref<1x128xf32, #tpu.memory_space<vmem>>, %arg6: memref<128x128xbf16, #tpu.memory_space<vmem>>, %arg7: memref<1x128xf32, #tpu.memory_space<vmem>>, %arg8: memref<128x128xbf16, #tpu.memory_space<vmem>>, %arg9: memref<1x128xf32, #tpu.memory_space<vmem>>, %arg10: memref<8x128xf32, #tpu.memory_space<vmem>>) attributes {dimension_semantics = [#tpu.dimension_semantics<parallel>], iteration_bounds = array<i64: 1>, scalar_prefetch = 0 : i64, scratch_operands = 0 : i64, tpu.core_type = #tpu.core_type<tc>, window_params = [{transform_indices = @transform_0, window_bounds = array<i64: 8, 32>}, {pipeline_mode = #tpu.pipeline_mode<synchronous>, transform_indices = @transform_1, window_bounds = array<i64: 32, 128>}, {pipeline_mode = #tpu.pipeline_mode<synchronous>, transform_indices = @transform_2, window_bounds = array<i64: 1, 128>}, {pipeline_mode = #tpu.pipeline_mode<synchronous>, transform_indices = @transform_3, window_bounds = array<i64: 128, 128>}, {pipeline_mode = #tpu.pipeline_mode<synchronous>, transform_indices = @transform_4, window_bounds = array<i64: 1, 128>}, {pipeline_mode = #tpu.pipeline_mode<synchronous>, transform_indices = @transform_5, window_bounds = array<i64: 128, 128>}, {pipeline_mode = #tpu.pipeline_mode<synchronous>, transform_indices = @transform_6, window_bounds = array<i64: 1, 128>}, {pipeline_mode = #tpu.pipeline_mode<synchronous>, transform_indices = @transform_7, window_bounds = array<i64: 128, 128>}, {pipeline_mode = #tpu.pipeline_mode<synchronous>, transform_indices = @transform_8, window_bounds = array<i64: 1, 128>}, {transform_indices = @transform_9, window_bounds = array<i64: 8, 128>}]} {
    %c0 = arith.constant 0 : index
    %c0_0 = arith.constant 0 : index
    %0 = vector.load %arg1[%c0, %c0_0] : memref<8x32xf32, #tpu.memory_space<vmem>>, vector<8x32xf32>
    %1 = arith.truncf %0 : vector<8x32xf32> to vector<8x32xbf16>
    %c0_1 = arith.constant 0 : index
    %c0_2 = arith.constant 0 : index
    %2 = vector.load %arg2[%c0_1, %c0_2] : memref<32x128xbf16, #tpu.memory_space<vmem>>, vector<32x128xbf16>
    %cst = arith.constant dense<0.000000e+00> : vector<8x128xf32>
    %3 = tpu.matmul %1, %2, %cst {dimension_numbers = #tpu.dot_dimension_numbers<[1], [0], [0], [1], [0, 0, 1, 1], [], []>} : vector<8x32xbf16>, vector<32x128xbf16>, vector<8x128xf32> -> vector<8x128xf32>
    %c0_3 = arith.constant 0 : index
    %c0_4 = arith.constant 0 : index
    %4 = vector.load %arg3[%c0_3, %c0_4] : memref<1x128xf32, #tpu.memory_space<vmem>>, vector<1x128xf32>
    %5 = vector.broadcast %4 : vector<1x128xf32> to vector<8x128xf32>
    %6 = arith.addf %3, %5 : vector<8x128xf32>
    %cst_5 = arith.constant 0.000000e+00 : f32
    %7 = vector.broadcast %cst_5 : f32 to vector<8x128xf32>
    %8 = arith.maximumf %6, %7 : vector<8x128xf32>
    %9 = arith.truncf %8 : vector<8x128xf32> to vector<8x128xbf16>
    %c0_6 = arith.constant 0 : index
    %c0_7 = arith.constant 0 : index
    %10 = vector.load %arg4[%c0_6, %c0_7] : memref<128x128xbf16, #tpu.memory_space<vmem>>, vector<128x128xbf16>
    %cst_8 = arith.constant dense<0.000000e+00> : vector<8x128xf32>
    %11 = tpu.matmul %9, %10, %cst_8 {dimension_numbers = #tpu.dot_dimension_numbers<[1], [0], [0], [1], [0, 0, 1, 1], [], []>} : vector<8x128xbf16>, vector<128x128xbf16>, vector<8x128xf32> -> vector<8x128xf32>
    %c0_9 = arith.constant 0 : index
    %c0_10 = arith.constant 0 : index
    %12 = vector.load %arg5[%c0_9, %c0_10] : memref<1x128xf32, #tpu.memory_space<vmem>>, vector<1x128xf32>
    %13 = vector.broadcast %12 : vector<1x128xf32> to vector<8x128xf32>
    %14 = arith.addf %11, %13 : vector<8x128xf32>
    %cst_11 = arith.constant 0.000000e+00 : f32
    %15 = vector.broadcast %cst_11 : f32 to vector<8x128xf32>
    %16 = arith.maximumf %14, %15 : vector<8x128xf32>
    %17 = arith.truncf %16 : vector<8x128xf32> to vector<8x128xbf16>
    %c0_12 = arith.constant 0 : index
    %c0_13 = arith.constant 0 : index
    %18 = vector.load %arg6[%c0_12, %c0_13] : memref<128x128xbf16, #tpu.memory_space<vmem>>, vector<128x128xbf16>
    %cst_14 = arith.constant dense<0.000000e+00> : vector<8x128xf32>
    %19 = tpu.matmul %17, %18, %cst_14 {dimension_numbers = #tpu.dot_dimension_numbers<[1], [0], [0], [1], [0, 0, 1, 1], [], []>} : vector<8x128xbf16>, vector<128x128xbf16>, vector<8x128xf32> -> vector<8x128xf32>
    %c0_15 = arith.constant 0 : index
    %c0_16 = arith.constant 0 : index
    %20 = vector.load %arg7[%c0_15, %c0_16] : memref<1x128xf32, #tpu.memory_space<vmem>>, vector<1x128xf32>
    %21 = vector.broadcast %20 : vector<1x128xf32> to vector<8x128xf32>
    %22 = arith.addf %19, %21 : vector<8x128xf32>
    %cst_17 = arith.constant 0.000000e+00 : f32
    %23 = vector.broadcast %cst_17 : f32 to vector<8x128xf32>
    %24 = arith.maximumf %22, %23 : vector<8x128xf32>
    %25 = arith.truncf %24 : vector<8x128xf32> to vector<8x128xbf16>
    %c0_18 = arith.constant 0 : index
    %c0_19 = arith.constant 0 : index
    %26 = vector.load %arg8[%c0_18, %c0_19] : memref<128x128xbf16, #tpu.memory_space<vmem>>, vector<128x128xbf16>
    %cst_20 = arith.constant dense<0.000000e+00> : vector<8x128xf32>
    %27 = tpu.matmul %25, %26, %cst_20 {dimension_numbers = #tpu.dot_dimension_numbers<[1], [0], [0], [1], [0, 0, 1, 1], [], []>} : vector<8x128xbf16>, vector<128x128xbf16>, vector<8x128xf32> -> vector<8x128xf32>
    %c0_21 = arith.constant 0 : index
    %c0_22 = arith.constant 0 : index
    %28 = vector.load %arg9[%c0_21, %c0_22] : memref<1x128xf32, #tpu.memory_space<vmem>>, vector<1x128xf32>
    %29 = vector.broadcast %28 : vector<1x128xf32> to vector<8x128xf32>
    %30 = arith.addf %27, %29 : vector<8x128xf32>
    %cst_23 = arith.constant dense<0xFF800000> : vector<8xf32>
    %31 = vector.multi_reduction <maximumf>, %30, %cst_23 [1] : vector<8x128xf32> to vector<8xf32>
    %32 = vector.shape_cast %31 : vector<8xf32> to vector<8x1xf32>
    %33 = vector.broadcast %32 : vector<8x1xf32> to vector<8x128xf32>
    %34 = arith.subf %30, %33 : vector<8x128xf32>
    %35 = math.exp %34 : vector<8x128xf32>
    %cst_24 = arith.constant dense<0.000000e+00> : vector<8xf32>
    %36 = vector.multi_reduction <add>, %35, %cst_24 [1] : vector<8x128xf32> to vector<8xf32>
    %37 = vector.shape_cast %36 : vector<8xf32> to vector<8x1xf32>
    %38 = math.log %37 : vector<8x1xf32>
    %39 = vector.broadcast %38 : vector<8x1xf32> to vector<8x128xf32>
    %40 = arith.subf %34, %39 : vector<8x128xf32>
    %c0_25 = arith.constant 0 : index
    %c0_26 = arith.constant 0 : index
    %41 = vector.load %arg10[%c0_25, %c0_26] : memref<8x128xf32, #tpu.memory_space<vmem>>, vector<8x128xf32>
    tpu.vector_store %arg10[%c0_25, %c0_26], %40 {strides = array<i32>} : memref<8x128xf32, #tpu.memory_space<vmem>>, vector<8x128xf32>,
    return
  }
  func.func @transform_0(%arg0: i32) -> (i32, i32) {
    %c0_i32 = arith.constant 0 : i32
    %c0_i32_0 = arith.constant 0 : i32
    return %arg0, %c0_i32 : i32, i32
  }
  func.func @transform_1(%arg0: i32) -> (i32, i32) {
    %c0_i32 = arith.constant 0 : i32
    %c0_i32_0 = arith.constant 0 : i32
    %c0_i32_1 = arith.constant 0 : i32
    return %c0_i32, %c0_i32_0 : i32, i32
  }
  func.func @transform_2(%arg0: i32) -> (i32, i32) {
    %c0_i32 = arith.constant 0 : i32
    %c0_i32_0 = arith.constant 0 : i32
    %c0_i32_1 = arith.constant 0 : i32
    return %c0_i32, %c0_i32_0 : i32, i32
  }
  func.func @transform_3(%arg0: i32) -> (i32, i32) {
    %c0_i32 = arith.constant 0 : i32
    %c0_i32_0 = arith.constant 0 : i32
    %c0_i32_1 = arith.constant 0 : i32
    return %c0_i32, %c0_i32_0 : i32, i32
  }
  func.func @transform_4(%arg0: i32) -> (i32, i32) {
    %c0_i32 = arith.constant 0 : i32
    %c0_i32_0 = arith.constant 0 : i32
    %c0_i32_1 = arith.constant 0 : i32
    return %c0_i32, %c0_i32_0 : i32, i32
  }
  func.func @transform_5(%arg0: i32) -> (i32, i32) {
    %c0_i32 = arith.constant 0 : i32
    %c0_i32_0 = arith.constant 0 : i32
    %c0_i32_1 = arith.constant 0 : i32
    return %c0_i32, %c0_i32_0 : i32, i32
  }
  func.func @transform_6(%arg0: i32) -> (i32, i32) {
    %c0_i32 = arith.constant 0 : i32
    %c0_i32_0 = arith.constant 0 : i32
    %c0_i32_1 = arith.constant 0 : i32
    return %c0_i32, %c0_i32_0 : i32, i32
  }
  func.func @transform_7(%arg0: i32) -> (i32, i32) {
    %c0_i32 = arith.constant 0 : i32
    %c0_i32_0 = arith.constant 0 : i32
    %c0_i32_1 = arith.constant 0 : i32
    return %c0_i32, %c0_i32_0 : i32, i32
  }
  func.func @transform_8(%arg0: i32) -> (i32, i32) {
    %c0_i32 = arith.constant 0 : i32
    %c0_i32_0 = arith.constant 0 : i32
    %c0_i32_1 = arith.constant 0 : i32
    return %c0_i32, %c0_i32_0 : i32, i32
  }
  func.func @transform_9(%arg0: i32) -> (i32, i32) {
    %c0_i32 = arith.constant 0 : i32
    %c0_i32_0 = arith.constant 0 : i32
    return %arg0, %c0_i32 : i32, i32
  }
}

</mosaic_0001>

<llo_original>
// kernel: neural_net_forward.1
$region0: #{neural_net_forward.1}
  #allocation0 [shape = 'u32[]', space=smem, size = 0x4, offset = 0x4, fixed_abs, tag = 'smem constant byte address 0x4 - core index']
  #allocation1 [shape = 'u32[144,128]{1,0:T(1,128)}', space=vmem, size = 0x12000, scoped, tag = 'internal scratch']
  %s0 = inlined_call_operand.hbm [shape: f32[8,32], index: 0, kind: input, shape index: {}]
  %s1 = inlined_call_operand.hbm [shape: bf16[32,128], index: 1, kind: input, shape index: {}]
  %s2 = inlined_call_operand.hbm [shape: f32[1,128], index: 2, kind: input, shape index: {}]
  %s3 = inlined_call_operand.hbm [shape: bf16[128,128], index: 3, kind: input, shape index: {}]
  %s4 = inlined_call_operand.vmem [shape: f32[1,128], index: 4, kind: input, shape index: {}]
  %s5 = inlined_call_operand.hbm [shape: bf16[128,128], index: 5, kind: input, shape index: {}]
  %s6 = inlined_call_operand.vmem [shape: f32[1,128], index: 6, kind: input, shape index: {}]
  %s7 = inlined_call_operand.hbm [shape: bf16[128,128], index: 7, kind: input, shape index: {}]
  %s8 = inlined_call_operand.vmem [shape: f32[1,128], index: 8, kind: input, shape index: {}]
  %s9 = inlined_call_operand.vmem [shape: f32[8,128], index: 9, kind: output, shape index: {}]
  %s10 = sld [smem:[#allocation0]]
  $region70: #{neural_net_forward.1} parent=0
    _
  %s12 = ssub.s32 1, %s10
  %s13 = scalar_select 0, %s12, %s10
  $region1: #{neural_net_forward.1} parent=0
    #allocation2 [shape = 'u8[4096]{0}', space=vmem, size = 0x1000, scoped, tag = 'input window, operand 0, single buffered']
    #allocation3 [shape = 's32[1]{0}', space=sflag, size = 0x4, scoped, tag = 'scoped memory for neural_net_forward.1']
    #allocation4 [shape = 'u8[8192]{0}', space=vmem, size = 0x2000, scoped, tag = 'input window, operand 1, single buffered']
    #allocation5 [shape = 's32[1]{0}', space=sflag, size = 0x4, scoped, tag = 'scoped memory for neural_net_forward.1']
    #allocation6 [shape = 'u8[512]{0}', space=vmem, size = 0x400, scoped, tag = 'input window, operand 2, single buffered']
    #allocation7 [shape = 'u8[32768]{0}', space=vmem, size = 0x8000, scoped, tag = 'input window, operand 3, single buffered']
    #allocation8 [shape = 's32[1]{0}', space=sflag, size = 0x4, scoped, tag = 'scoped memory for neural_net_forward.1']
    #allocation9 [shape = 'u8[32768]{0}', space=vmem, size = 0x8000, scoped, tag = 'input window, operand 5, single buffered']
    #allocation10 [shape = 'u8[32768]{0}', space=vmem, size = 0x8000, scoped, tag = 'input window, operand 7, single buffered']
    #allocation11 [shape = 's32[1]{0}', space=sflag, size = 0x4, scoped, tag = 'scoped memory for neural_net_forward.1']
    %14 = vsyncpa [#allocation3], 0
    %15 = vsyncpa [#allocation5], 0
    %16 = vsyncpa [#allocation8], 0
    %17 = vsyncpa [#allocation11], 0
    // Predicated region
    $region2: #{neural_net_forward.1} parent=1 // pred_check
      _
    $region3: #{neural_net_forward.1} parent=1 // pred_check_branch
      %19 = sbr.rel (0) target = $region5
    $region4: #{neural_net_forward.1} parent=1 // pred_region
      %s21 = ssub.s32 128, 128
      %22 = vsyncadd [#allocation3], %s21
      %s24 = sshll.u32 [#allocation2], 4
      %s25 = int_to_ptr.vmem [resolvable:$true] %s24
      %27 = dma.hbm_to_vmem [thread:$0]  %s0, 128, %s25, [#allocation3]
    $region5: #{neural_net_forward.1} parent=1 // pred_fallthru
      _
    // Predicated region
    $region6: #{neural_net_forward.1} parent=1 // pred_check
      _
    $region7: #{neural_net_forward.1} parent=1 // pred_check_branch
      %29 = sbr.rel (0) target = $region9
    $region8: #{neural_net_forward.1} parent=1 // pred_region
      %s31 = ssub.s32 256, 256
      %32 = vsyncadd [#allocation5], %s31
      %s33 = sshll.u32 [#allocation4], 4
      %s34 = int_to_ptr.vmem [resolvable:$true] %s33
      %39 = dma.hbm_to_vmem [thread:$0]  %s1, 256, %s34, [#allocation5], 64, 64, 4
    $region9: #{neural_net_forward.1} parent=1 // pred_fallthru
      _
    // Predicated region
    $region10: #{neural_net_forward.1} parent=1 // pred_check
      _
    $region11: #{neural_net_forward.1} parent=1 // pred_check_branch
      %41 = sbr.rel (0) target = $region13
    $region12: #{neural_net_forward.1} parent=1 // pred_region
      %s43 = ssub.s32 16, 16
      %44 = vsyncadd [#allocation5], %s43
      %s46 = sshll.u32 [#allocation6], 4
      %s47 = int_to_ptr.vmem [resolvable:$true] %s46
      %49 = dma.hbm_to_vmem [thread:$0]  %s2, 16, %s47, [#allocation5]
    $region13: #{neural_net_forward.1} parent=1 // pred_fallthru
      _
    // Predicated region
    $region14: #{neural_net_forward.1} parent=1 // pred_check
      _
    $region15: #{neural_net_forward.1} parent=1 // pred_check_branch
      %51 = sbr.rel (0) target = $region17
    $region16: #{neural_net_forward.1} parent=1 // pred_region
      %s53 = ssub.s32 1024, 1024
      %54 = vsyncadd [#allocation8], %s53
      %s55 = sshll.u32 [#allocation7], 4
      %s56 = int_to_ptr.vmem [resolvable:$true] %s55
      %61 = dma.hbm_to_vmem [thread:$0]  %s3, 1024, %s56, [#allocation8], 64, 64, 4
    $region17: #{neural_net_forward.1} parent=1 // pred_fallthru
      _
    // Predicated region
    $region18: #{neural_net_forward.1} parent=1 // pred_check
      _
    $region19: #{neural_net_forward.1} parent=1 // pred_check_branch
      %63 = sbr.rel (0) target = $region21
    $region20: #{neural_net_forward.1} parent=1 // pred_region
      _
    $region21: #{neural_net_forward.1} parent=1 // pred_fallthru
      _
    // Predicated region
    $region22: #{neural_net_forward.1} parent=1 // pred_check
      _
    $region23: #{neural_net_forward.1} parent=1 // pred_check_branch
      %65 = sbr.rel (0) target = $region25
    $region24: #{neural_net_forward.1} parent=1 // pred_region
      %s67 = ssub.s32 1024, 1024
      %68 = vsyncadd [#allocation8], %s67
      %s69 = sshll.u32 [#allocation9], 4
      %s70 = int_to_ptr.vmem [resolvable:$true] %s69
      %75 = dma.hbm_to_vmem [thread:$0]  %s5, 1024, %s70, [#allocation8], 64, 64, 4
    $region25: #{neural_net_forward.1} parent=1 // pred_fallthru
      _
    // Predicated region
    $region26: #{neural_net_forward.1} parent=1 // pred_check
      _
    $region27: #{neural_net_forward.1} parent=1 // pred_check_branch
      %77 = sbr.rel (0) target = $region29
    $region28: #{neural_net_forward.1} parent=1 // pred_region
      _
    $region29: #{neural_net_forward.1} parent=1 // pred_fallthru
      _
    // Predicated region
    $region30: #{neural_net_forward.1} parent=1 // pred_check
      _
    $region31: #{neural_net_forward.1} parent=1 // pred_check_branch
      %79 = sbr.rel (0) target = $region33
    $region32: #{neural_net_forward.1} parent=1 // pred_region
      %s81 = ssub.s32 1024, 1024
      %82 = vsyncadd [#allocation11], %s81
      %s83 = sshll.u32 [#allocation10], 4
      %s84 = int_to_ptr.vmem [resolvable:$true] %s83
      %89 = dma.hbm_to_vmem [thread:$0]  %s7, 1024, %s84, [#allocation11], 64, 64, 4
    $region33: #{neural_net_forward.1} parent=1 // pred_fallthru
      _
    // Predicated region
    $region34: #{neural_net_forward.1} parent=1 // pred_check
      _
    $region35: #{neural_net_forward.1} parent=1 // pred_check_branch
      %91 = sbr.rel (0) target = $region37
    $region36: #{neural_net_forward.1} parent=1 // pred_region
      _
    $region37: #{neural_net_forward.1} parent=1 // pred_fallthru
      _
    // Predicated region
    $region38: #{neural_net_forward.1} parent=1 // pred_check
      _
    $region39: #{neural_net_forward.1} parent=1 // pred_check_branch
      %93 = sbr.rel (0) target = $region41
    $region40: #{neural_net_forward.1} parent=1 // pred_region
      %94 = dma.done [#allocation3], 128
    $region41: #{neural_net_forward.1} parent=1 // pred_fallthru
      _
    // Predicated region
    $region42: #{neural_net_forward.1} parent=1 // pred_check
      _
    $region43: #{neural_net_forward.1} parent=1 // pred_check_branch
      %96 = sbr.rel (0) target = $region45
    $region44: #{neural_net_forward.1} parent=1 // pred_region
      %97 = dma.done [#allocation5], 256
    $region45: #{neural_net_forward.1} parent=1 // pred_fallthru
      _
    // Predicated region
    $region46: #{neural_net_forward.1} parent=1 // pred_check
      _
    $region47: #{neural_net_forward.1} parent=1 // pred_check_branch
      %99 = sbr.rel (0) target = $region49
    $region48: #{neural_net_forward.1} parent=1 // pred_region
      %100 = dma.done [#allocation5], 16
    $region49: #{neural_net_forward.1} parent=1 // pred_fallthru
      _
    // Predicated region
    $region50: #{neural_net_forward.1} parent=1 // pred_check
      _
    $region51: #{neural_net_forward.1} parent=1 // pred_check_branch
      %102 = sbr.rel (0) target = $region53
    $region52: #{neural_net_forward.1} parent=1 // pred_region
      %103 = dma.done [#allocation8], 1024
    $region53: #{neural_net_forward.1} parent=1 // pred_fallthru
      _
    // Predicated region
    $region54: #{neural_net_forward.1} parent=1 // pred_check
      _
    $region55: #{neural_net_forward.1} parent=1 // pred_check_branch
      %105 = sbr.rel (0) target = $region57
    $region56: #{neural_net_forward.1} parent=1 // pred_region
      %106 = dma.done [#allocation8], 1024
    $region57: #{neural_net_forward.1} parent=1 // pred_fallthru
      _
    // Predicated region
    $region58: #{neural_net_forward.1} parent=1 // pred_check
      _
    $region59: #{neural_net_forward.1} parent=1 // pred_check_branch
      %108 = sbr.rel (0) target = $region61
    $region60: #{neural_net_forward.1} parent=1 // pred_region
      %109 = dma.done [#allocation11], 1024
    $region61: #{neural_net_forward.1} parent=1 // pred_fallthru
      _
    %v111 = vld [vmem:[#allocation2] sm:$0xff]
    %v112 = vpack.c.bf16 %v111, %v111
    %v113 = vld [vmem:[#allocation4] sm:$0xf]
    %v114 = vld [vmem:[#allocation4 + $0x4] sm:$0xf]
    %v115 = vld [vmem:[#allocation4 + $0x8] sm:$0xf]
    %v116 = vld [vmem:[#allocation4 + $0xc] sm:$0xf]
    %v117 = vld [vmem:[#allocation6] sm:$0x1]
    %v119 = vlaneseq
    %v120 = vshrl.u32 %v119, 7
    %v121 = vsub.s32 0, %v120
    %v122 = vrot.slane %v117, %v121
    %v128 = vunpack.c.l.b16 %v113
    %v129 = vunpack.c.l.b16 %v114
    %v130 = vunpack.c.l.b16 %v115
    %v131 = vunpack.c.l.b16 %v116
    %v132 = vpack.c.b16 %v129, %v128
    %v133 = vpack.c.b16 %v131, %v130
    %vm136 = vcmask 261120
    %v138 = vsel %vm136, %v112, 0
    %140 = vmatprep.subr.bf16.mxu0 0
    %141 = vmatpush1.bf16.msra.mxu0 0
    %142 = vmatprep.subr.bf16.mxu0 0
    %143 = vmatpush1.bf16.msra.mxu0 0
    %144 = vmatprep.subr.bf16.mxu0 0
    %145 = vmatpush1.bf16.msra.mxu0 0
    %146 = vmatprep.subr.bf16.mxu0 0
    %147 = vmatpush1.bf16.msra.mxu0 0
    %148 = vmatprep.subr.bf16.mxu0 0
    %149 = vmatpush1.bf16.msra.mxu0 0
    %150 = vmatprep.subr.bf16.mxu0 0
    %151 = vmatpush1.bf16.msra.mxu0 0
    %152 = vmatprep.subr.bf16.mxu0 0
    %153 = vmatpush1.bf16.msra.mxu0 %v133
    %154 = vmatprep.subr.bf16.mxu0 0
    %155 = vmatpush1.bf16.msra.mxu0 %v132
    %156 = vmatprep.subr.bf16.mxu0 0
    %157 = vmatpush2.bf16.msra.mxu0 0
    %158 = vmatprep.subr.bf16.mxu0 0
    %159 = vmatpush2.bf16.msra.mxu0 0
    %160 = vmatprep.subr.bf16.mxu0 0
    %161 = vmatpush2.bf16.msra.mxu0 0
    %162 = vmatprep.subr.bf16.mxu0 0
    %163 = vmatpush2.bf16.msra.mxu0 0
    %164 = vmatprep.subr.bf16.mxu0 0
    %165 = vmatpush2.bf16.msra.mxu0 0
    %166 = vmatprep.subr.bf16.mxu0 0
    %167 = vmatpush2.bf16.msra.mxu0 0
    %168 = vmatprep.subr.bf16.mxu0 0
    %169 = vmatpush2.bf16.msra.mxu0 0
    %170 = vmatprep.subr.bf16.mxu0 0
    %171 = vmatpush2.bf16.msra.mxu0 0
    %172 = vmatprep.mubr.bf16.mxu0 0
    %173 = vmatmul.mubr.bf16.gmra.mxu0 %v138
    %v174 = vpop.f32.mrf.mxu0
    %v175 = vadd.f32 %v122, %v174
    %v176 = vpop.f32.mrf.mxu0
    %v177 = vpop.f32.mrf.mxu0
    %v178 = vpop.f32.mrf.mxu0
    %179 = vdwg.mxu0
    %v180 = vmax.f32 %v175, 0.0
    %v181 = vpack.c.bf16 %v180, %v180
    %v182 = vld [vmem:[#allocation7] sm:$0xf]
    %v183 = vld [vmem:[#allocation7 + $0x4] sm:$0xf]
    %v184 = vld [vmem:[#allocation7 + $0x8] sm:$0xf]
    %v185 = vld [vmem:[#allocation7 + $0xc] sm:$0xf]
    %v186 = vld [vmem:[#allocation7 + $0x10] sm:$0xf]
    %v187 = vld [vmem:[#allocation7 + $0x14] sm:$0xf]
    %v188 = vld [vmem:[#allocation7 + $0x18] sm:$0xf]
    %v189 = vld [vmem:[#allocation7 + $0x1c] sm:$0xf]
    %v190 = vld [vmem:[#allocation7 + $0x20] sm:$0xf]
    %v191 = vld [vmem:[#allocation7 + $0x24] sm:$0xf]
    %v192 = vld [vmem:[#allocation7 + $0x28] sm:$0xf]
    %v193 = vld [vmem:[#allocation7 + $0x2c] sm:$0xf]
    %v194 = vld [vmem:[#allocation7 + $0x30] sm:$0xf]
    %v195 = vld [vmem:[#allocation7 + $0x34] sm:$0xf]
    %v196 = vld [vmem:[#allocation7 + $0x38] sm:$0xf]
    %v197 = vld [vmem:[#allocation7 + $0x3c] sm:$0xf]
    %v198 = vld [vmem:[%s4] sm:$0x1]
    %v200 = vlaneseq
    %v201 = vshrl.u32 %v200, 7
    %v202 = vsub.s32 0, %v201
    %v203 = vrot.slane %v198, %v202
    %v221 = vunpack.c.l.b16 %v182
    %v222 = vunpack.c.l.b16 %v183
    %v223 = vunpack.c.l.b16 %v184
    %v224 = vunpack.c.l.b16 %v185
    %v225 = vunpack.c.l.b16 %v186
    %v226 = vunpack.c.l.b16 %v187
    %v227 = vunpack.c.l.b16 %v188
    %v228 = vunpack.c.l.b16 %v189
    %v229 = vunpack.c.l.b16 %v190
    %v230 = vunpack.c.l.b16 %v191
    %v231 = vunpack.c.l.b16 %v192
    %v232 = vunpack.c.l.b16 %v193
    %v233 = vunpack.c.l.b16 %v194
    %v234 = vunpack.c.l.b16 %v195
    %v235 = vunpack.c.l.b16 %v196
    %v236 = vunpack.c.l.b16 %v197
    %v237 = vpack.c.b16 %v222, %v221
    %v238 = vpack.c.b16 %v224, %v223
    %v239 = vpack.c.b16 %v226, %v225
    %v240 = vpack.c.b16 %v228, %v227
    %v241 = vpack.c.b16 %v230, %v229
    %v242 = vpack.c.b16 %v232, %v231
    %v243 = vpack.c.b16 %v234, %v233
    %v244 = vpack.c.b16 %v236, %v235
    %253 = vmatprep.subr.bf16.mxu0 0
    %254 = vmatpush1.bf16.msra.mxu0 %v244
    %255 = vmatprep.subr.bf16.mxu0 0
    %256 = vmatpush1.bf16.msra.mxu0 %v243
    %257 = vmatprep.subr.bf16.mxu0 0
    %258 = vmatpush1.bf16.msra.mxu0 %v242
    %259 = vmatprep.subr.bf16.mxu0 0
    %260 = vmatpush1.bf16.msra.mxu0 %v241
    %261 = vmatprep.subr.bf16.mxu0 0
    %262 = vmatpush1.bf16.msra.mxu0 %v240
    %263 = vmatprep.subr.bf16.mxu0 0
    %264 = vmatpush1.bf16.msra.mxu0 %v239
    %265 = vmatprep.subr.bf16.mxu0 0
    %266 = vmatpush1.bf16.msra.mxu0 %v238
    %267 = vmatprep.subr.bf16.mxu0 0
    %268 = vmatpush1.bf16.msra.mxu0 %v237
    %269 = vmatprep.subr.bf16.mxu0 0
    %270 = vmatpush2.bf16.msra.mxu0 0
    %271 = vmatprep.subr.bf16.mxu0 0
    %272 = vmatpush2.bf16.msra.mxu0 0
    %273 = vmatprep.subr.bf16.mxu0 0
    %274 = vmatpush2.bf16.msra.mxu0 0
    %275 = vmatprep.subr.bf16.mxu0 0
    %276 = vmatpush2.bf16.msra.mxu0 0
    %277 = vmatprep.subr.bf16.mxu0 0
    %278 = vmatpush2.bf16.msra.mxu0 0
    %279 = vmatprep.subr.bf16.mxu0 0
    %280 = vmatpush2.bf16.msra.mxu0 0
    %281 = vmatprep.subr.bf16.mxu0 0
    %282 = vmatpush2.bf16.msra.mxu0 0
    %283 = vmatprep.subr.bf16.mxu0 0
    %284 = vmatpush2.bf16.msra.mxu0 0
    %285 = vmatprep.mubr.bf16.mxu0 0
    %286 = vmatmul.mubr.bf16.gmra.mxu0 %v181
    %v287 = vpop.f32.mrf.mxu0
    %v288 = vadd.f32 %v203, %v287
    %v289 = vpop.f32.mrf.mxu0
    %v290 = vpop.f32.mrf.mxu0
    %v291 = vpop.f32.mrf.mxu0
    %292 = vdwg.mxu0
    %v293 = vmax.f32 %v288, 0.0
    %v294 = vpack.c.bf16 %v293, %v293
    %v295 = vld [vmem:[#allocation9] sm:$0xf]
    %v296 = vld [vmem:[#allocation9 + $0x4] sm:$0xf]
    %v297 = vld [vmem:[#allocation9 + $0x8] sm:$0xf]
    %v298 = vld [vmem:[#allocation9 + $0xc] sm:$0xf]
    %v299 = vld [vmem:[#allocation9 + $0x10] sm:$0xf]
    %v300 = vld [vmem:[#allocation9 + $0x14] sm:$0xf]
    %v301 = vld [vmem:[#allocation9 + $0x18] sm:$0xf]
    %v302 = vld [vmem:[#allocation9 + $0x1c] sm:$0xf]
    %v303 = vld [vmem:[#allocation9 + $0x20] sm:$0xf]
    %v304 = vld [vmem:[#allocation9 + $0x24] sm:$0xf]
    %v305 = vld [vmem:[#allocation9 + $0x28] sm:$0xf]
    %v306 = vld [vmem:[#allocation9 + $0x2c] sm:$0xf]
    %v307 = vld [vmem:[#allocation9 + $0x30] sm:$0xf]
    %v308 = vld [vmem:[#allocation9 + $0x34] sm:$0xf]
    %v309 = vld [vmem:[#allocation9 + $0x38] sm:$0xf]
    %v310 = vld [vmem:[#allocation9 + $0x3c] sm:$0xf]
    %v311 = vld [vmem:[%s6] sm:$0x1]
    %v313 = vlaneseq
    %v314 = vshrl.u32 %v313, 7
    %v315 = vsub.s32 0, %v314
    %v316 = vrot.slane %v311, %v315
    %v334 = vunpack.c.l.b16 %v295
    %v335 = vunpack.c.l.b16 %v296
    %v336 = vunpack.c.l.b16 %v297
    %v337 = vunpack.c.l.b16 %v298
    %v338 = vunpack.c.l.b16 %v299
    %v339 = vunpack.c.l.b16 %v300
    %v340 = vunpack.c.l.b16 %v301
    %v341 = vunpack.c.l.b16 %v302
    %v342 = vunpack.c.l.b16 %v303
    %v343 = vunpack.c.l.b16 %v304
    %v344 = vunpack.c.l.b16 %v305
    %v345 = vunpack.c.l.b16 %v306
    %v346 = vunpack.c.l.b16 %v307
    %v347 = vunpack.c.l.b16 %v308
    %v348 = vunpack.c.l.b16 %v309
    %v349 = vunpack.c.l.b16 %v310
    %v350 = vpack.c.b16 %v335, %v334
    %v351 = vpack.c.b16 %v337, %v336
    %v352 = vpack.c.b16 %v339, %v338
    %v353 = vpack.c.b16 %v341, %v340
    %v354 = vpack.c.b16 %v343, %v342
    %v355 = vpack.c.b16 %v345, %v344
    %v356 = vpack.c.b16 %v347, %v346
    %v357 = vpack.c.b16 %v349, %v348
    %366 = vmatprep.subr.bf16.mxu0 0
    %367 = vmatpush1.bf16.msra.mxu0 %v357
    %368 = vmatprep.subr.bf16.mxu0 0
    %369 = vmatpush1.bf16.msra.mxu0 %v356
    %370 = vmatprep.subr.bf16.mxu0 0
    %371 = vmatpush1.bf16.msra.mxu0 %v355
    %372 = vmatprep.subr.bf16.mxu0 0
    %373 = vmatpush1.bf16.msra.mxu0 %v354
    %374 = vmatprep.subr.bf16.mxu0 0
    %375 = vmatpush1.bf16.msra.mxu0 %v353
    %376 = vmatprep.subr.bf16.mxu0 0
    %377 = vmatpush1.bf16.msra.mxu0 %v352
    %378 = vmatprep.subr.bf16.mxu0 0
    %379 = vmatpush1.bf16.msra.mxu0 %v351
    %380 = vmatprep.subr.bf16.mxu0 0
    %381 = vmatpush1.bf16.msra.mxu0 %v350
    %382 = vmatprep.subr.bf16.mxu0 0
    %383 = vmatpush2.bf16.msra.mxu0 0
    %384 = vmatprep.subr.bf16.mxu0 0
    %385 = vmatpush2.bf16.msra.mxu0 0
    %386 = vmatprep.subr.bf16.mxu0 0
    %387 = vmatpush2.bf16.msra.mxu0 0
    %388 = vmatprep.subr.bf16.mxu0 0
    %389 = vmatpush2.bf16.msra.mxu0 0
    %390 = vmatprep.subr.bf16.mxu0 0
    %391 = vmatpush2.bf16.msra.mxu0 0
    %392 = vmatprep.subr.bf16.mxu0 0
    %393 = vmatpush2.bf16.msra.mxu0 0
    %394 = vmatprep.subr.bf16.mxu0 0
    %395 = vmatpush2.bf16.msra.mxu0 0
    %396 = vmatprep.subr.bf16.mxu0 0
    %397 = vmatpush2.bf16.msra.mxu0 0
    %398 = vmatprep.mubr.bf16.mxu0 0
    %399 = vmatmul.mubr.bf16.gmra.mxu0 %v294
    %v400 = vpop.f32.mrf.mxu0
    %v401 = vadd.f32 %v316, %v400
    %v402 = vpop.f32.mrf.mxu0
    %v403 = vpop.f32.mrf.mxu0
    %v404 = vpop.f32.mrf.mxu0
    %405 = vdwg.mxu0
    %v406 = vmax.f32 %v401, 0.0
    %v407 = vpack.c.bf16 %v406, %v406
    %v408 = vld [vmem:[#allocation10] sm:$0xf]
    %v409 = vld [vmem:[#allocation10 + $0x4] sm:$0xf]
    %v410 = vld [vmem:[#allocation10 + $0x8] sm:$0xf]
    %v411 = vld [vmem:[#allocation10 + $0xc] sm:$0xf]
    %v412 = vld [vmem:[#allocation10 + $0x10] sm:$0xf]
    %v413 = vld [vmem:[#allocation10 + $0x14] sm:$0xf]
    %v414 = vld [vmem:[#allocation10 + $0x18] sm:$0xf]
    %v415 = vld [vmem:[#allocation10 + $0x1c] sm:$0xf]
    %v416 = vld [vmem:[#allocation10 + $0x20] sm:$0xf]
    %v417 = vld [vmem:[#allocation10 + $0x24] sm:$0xf]
    %v418 = vld [vmem:[#allocation10 + $0x28] sm:$0xf]
    %v419 = vld [vmem:[#allocation10 + $0x2c] sm:$0xf]
    %v420 = vld [vmem:[#allocation10 + $0x30] sm:$0xf]
    %v421 = vld [vmem:[#allocation10 + $0x34] sm:$0xf]
    %v422 = vld [vmem:[#allocation10 + $0x38] sm:$0xf]
    %v423 = vld [vmem:[#allocation10 + $0x3c] sm:$0xf]
    %v424 = vld [vmem:[%s8] sm:$0x1]
    %v426 = vlaneseq
    %v427 = vshrl.u32 %v426, 7
    %v428 = vsub.s32 0, %v427
    %v429 = vrot.slane %v424, %v428
    %v447 = vunpack.c.l.b16 %v408
    %v448 = vunpack.c.l.b16 %v409
    %v449 = vunpack.c.l.b16 %v410
    %v450 = vunpack.c.l.b16 %v411
    %v451 = vunpack.c.l.b16 %v412
    %v452 = vunpack.c.l.b16 %v413
    %v453 = vunpack.c.l.b16 %v414
    %v454 = vunpack.c.l.b16 %v415
    %v455 = vunpack.c.l.b16 %v416
    %v456 = vunpack.c.l.b16 %v417
    %v457 = vunpack.c.l.b16 %v418
    %v458 = vunpack.c.l.b16 %v419
    %v459 = vunpack.c.l.b16 %v420
    %v460 = vunpack.c.l.b16 %v421
    %v461 = vunpack.c.l.b16 %v422
    %v462 = vunpack.c.l.b16 %v423
    %v463 = vpack.c.b16 %v448, %v447
    %v464 = vpack.c.b16 %v450, %v449
    %v465 = vpack.c.b16 %v452, %v451
    %v466 = vpack.c.b16 %v454, %v453
    %v467 = vpack.c.b16 %v456, %v455
    %v468 = vpack.c.b16 %v458, %v457
    %v469 = vpack.c.b16 %v460, %v459
    %v470 = vpack.c.b16 %v462, %v461
    %479 = vmatprep.subr.bf16.mxu0 0
    %480 = vmatpush1.bf16.msra.mxu0 %v470
    %481 = vmatprep.subr.bf16.mxu0 0
    %482 = vmatpush1.bf16.msra.mxu0 %v469
    %483 = vmatprep.subr.bf16.mxu0 0
    %484 = vmatpush1.bf16.msra.mxu0 %v468
    %485 = vmatprep.subr.bf16.mxu0 0
    %486 = vmatpush1.bf16.msra.mxu0 %v467
    %487 = vmatprep.subr.bf16.mxu0 0
    %488 = vmatpush1.bf16.msra.mxu0 %v466
    %489 = vmatprep.subr.bf16.mxu0 0
    %490 = vmatpush1.bf16.msra.mxu0 %v465
    %491 = vmatprep.subr.bf16.mxu0 0
    %492 = vmatpush1.bf16.msra.mxu0 %v464
    %493 = vmatprep.subr.bf16.mxu0 0
    %494 = vmatpush1.bf16.msra.mxu0 %v463
    %495 = vmatprep.subr.bf16.mxu0 0
    %496 = vmatpush2.bf16.msra.mxu0 0
    %497 = vmatprep.subr.bf16.mxu0 0
    %498 = vmatpush2.bf16.msra.mxu0 0
    %499 = vmatprep.subr.bf16.mxu0 0
    %500 = vmatpush2.bf16.msra.mxu0 0
    %501 = vmatprep.subr.bf16.mxu0 0
    %502 = vmatpush2.bf16.msra.mxu0 0
    %503 = vmatprep.subr.bf16.mxu0 0
    %504 = vmatpush2.bf16.msra.mxu0 0
    %505 = vmatprep.subr.bf16.mxu0 0
    %506 = vmatpush2.bf16.msra.mxu0 0
    %507 = vmatprep.subr.bf16.mxu0 0
    %508 = vmatpush2.bf16.msra.mxu0 0
    %509 = vmatprep.subr.bf16.mxu0 0
    %510 = vmatpush2.bf16.msra.mxu0 0
    %511 = vmatprep.mubr.bf16.mxu0 0
    %512 = vmatmul.mubr.bf16.gmra.mxu0 %v407
    %v513 = vpop.f32.mrf.mxu0
    %v514 = vadd.f32 %v429, %v513
    %v515 = vpop.f32.mrf.mxu0
    %v516 = vpop.f32.mrf.mxu0
    %v517 = vpop.f32.mrf.mxu0
    %518 = vdwg.mxu0
    %519 = vmax.xlane.f32.xlu0 %v514
    %v520 = vpop.xlane.xlu0 %519
    %v521 = vsub.f32 %v514, %v520
    %v522 = vmul.f32 %v521, 1.442695
    %v523 = vpow.pop %v522
    %524 = vadd.xlane.f32.xlu0 %v523
    %v525 = vpop.xlane.xlu0 %524
    %v526 = vlog2.pop %v525
    %v527 = vmul.f32 %v526, 0.6931472
    %v528 = vsub.f32 %v521, %v527
    %529 = vst [vmem:[%s9] sm:$0xff] %v528
    // Predicated region
    $region62: #{neural_net_forward.1} parent=1 // pred_check
      _
    $region63: #{neural_net_forward.1} parent=1 // pred_check_branch
      %531 = sbr.rel (0) target = $region65
    $region64: #{neural_net_forward.1} parent=1 // pred_region
      _
    $region65: #{neural_net_forward.1} parent=1 // pred_fallthru
      _
    // Predicated region
    $region66: #{neural_net_forward.1} parent=1 // pred_check
      _
    $region67: #{neural_net_forward.1} parent=1 // pred_check_branch
      %533 = sbr.rel (0) target = $region69
    $region68: #{neural_net_forward.1} parent=1 // pred_region
      _
    $region69: #{neural_net_forward.1} parent=1 // pred_fallthru
      _
    %534 = vsyncpa [#allocation3], 1
    %535 = vsyncpa [#allocation5], 1
    %536 = vsyncpa [#allocation8], 1
    %537 = vsyncpa [#allocation11], 1

</llo_original>
